<compile_context>
chip_gen: v5e
topology: v5e:2x2
jax: 0.10.0
libtpu: 0.0.40
codegen_flags: <defaults>
</compile_context>

<pallas_src>
import functools
import re

import jax
import jax.numpy as jnp
from jax.experimental import pallas as pl
from jax.experimental.pallas import tpu as pltpu


# ---------------------------------------------------------------------------
# math helpers
# ---------------------------------------------------------------------------
_SQRT_2_OVER_PI = 0.7978845608028654


def _gelu_tanh(x):
    """torch.nn.GELU(approximate='tanh'), constants folded, x*x reused."""
    dt = x.dtype
    c1 = jnp.asarray(_SQRT_2_OVER_PI, dt)
    c2 = jnp.asarray(_SQRT_2_OVER_PI * 0.044715, dt)
    half = jnp.asarray(0.5, dt)
    x2 = x * x
    u = x * (c1 + c2 * x2)                   # == sqrt(2/pi) * (x + 0.044715 x^3)
    return x * (half + half * jnp.tanh(u))   # == 0.5 * x * (1 + tanh(u))


# ---------------------------------------------------------------------------
# kernel body
# ---------------------------------------------------------------------------
def _block_kernel(x_ref, w_ref, b_ref, o_ref, *, nb, compute_dtype):
    """One (batch-pack, spatial-tile) block in (nb, C, TS) layout (TS on lanes).

    x_ref: (nb, C, TS)  input tile (I/O dtype)
    w_ref: (C, C)       1x1 conv weight (C_out, C_in), compute dtype
    b_ref: (C, 1)       1x1 conv bias (f32 column, broadcasts over TS)
    o_ref: (nb, C, TS)  output tile (I/O dtype)
    """
    x = x_ref[...]                                   # one lane-dense load
    h = _gelu_tanh(x.astype(compute_dtype))          # VPU + EUP, whole block
    w = w_ref[...]
    b = b_ref[...]                                   # f32
    for i in range(nb):                              # tiny static unroll
        # 1x1 conv over channels: (C_out, C_in) @ (C_in, TS) -> (C_out, TS), f32 acc
        y = jnp.dot(w, h[i], preferred_element_type=jnp.float32)
        # bias + residual skip, lane-dense store in the I/O dtype
        o_ref[i] = (y + b).astype(o_ref.dtype) + x[i]


# ---------------------------------------------------------------------------
# hardware queries (safe fallbacks)
# ---------------------------------------------------------------------------
def _tpu_generation():
    try:
        kind = jax.devices()[0].device_kind          # e.g. "TPU v5 lite", "TPU v6e"
        m = re.search(r"v(\d+)", kind)
        return int(m.group(1)) if m else 0
    except Exception:
        return 0


def _vmem_capacity_bytes():
    try:
        return int(pltpu.get_tpu_info().vmem_capacity_bytes)
    except Exception:
        return 64 << 20                              # conservative (v7x per-TC)


# ---------------------------------------------------------------------------
# tiling policy
# ---------------------------------------------------------------------------
def _pick_nb(N, C, itemsize):
    """Batch items per block so nb*C rows fill one vreg's sublane extent."""
    sublanes = 32 // itemsize                        # 8 (f32), 16 (bf16)
    best = 1
    for nb in range(1, N + 1):
        if N % nb == 0 and nb * C <= sublanes:
            best = nb
    return best


def _pick_tile_s(S, C, nb, itemsize, tile_budget, cap=65536):
    """Largest lane-aligned spatial tile that fits the VMEM tile budget."""
    per_lane = 4 * nb * C * itemsize                 # in + out, double-buffered
    by_vmem = (tile_budget // per_lane) // 128 * 128
    cap = max(128, min(cap, by_vmem))
    if S <= cap:
        return S                                     # block == full dim is legal
    if S % 128 == 0:
        # prefer an exact divisor if it is not much smaller than the cap
        for t in range(cap, cap // 2, -128):
            if S % t == 0:
                return t
    return cap                                       # ragged last block (masked)


def _ensure_min_steps(N, S, nb, tile_s, min_steps=2):
    """Keep >= min_steps grid steps so v7x's 2 TensorCores both get work."""
    def steps(nb_, ts_):
        return (N // nb_) * pl.cdiv(S, ts_)
    while nb > 1 and steps(nb, tile_s) < min_steps:  # unpack batch first
        nb -= 1
        while nb > 1 and N % nb:
            nb -= 1
    while tile_s > 128 and steps(nb, tile_s) < min_steps:
        tile_s = max(128, ((tile_s // 2) + 127) // 128 * 128)
    return nb, tile_s


# ---------------------------------------------------------------------------
# wrapper (UnconditionedModule.forward)
# ---------------------------------------------------------------------------
def unconditioned_module(x_nchw, cond=None, params=None, *, tile_s=None):
    """UnconditionedModule.forward: ignores `cond`, applies the wrapped block."""
    del cond  # UnconditionedModule never passes cond to the wrapped module.
    N, C, H, W = x_nchw.shape
    S = H * W
    io_dtype = x_nchw.dtype
    itemsize = jnp.dtype(io_dtype).itemsize

    x = x_nchw.reshape(N, C, S)                      # free: no data movement

    gen = _tpu_generation()
    vmem_cap = _vmem_capacity_bytes()

    # bf16 elementwise math only where VALU/EUP are bf16-capable (v6e / v7x);
    # v5e and older stay f32 (they are strictly HBM-bound anyway).
    if io_dtype == jnp.bfloat16 and gen >= 6:
        compute_dtype = jnp.bfloat16
    else:
        compute_dtype = jnp.float32

    # Generation-aware budgets: v7x has 64 MiB VMEM per TC, v5e/v6e 128 MiB.
    if vmem_cap <= (96 << 20):                       # v7x-class
        tile_budget, vmem_ceiling = 16 << 20, 48 << 20
    else:                                            # v5e / v6e
        tile_budget, vmem_ceiling = 28 << 20, 96 << 20

    nb = _pick_nb(N, C, itemsize)
    if tile_s is None:
        tile_s = _pick_tile_s(S, C, nb, itemsize, tile_budget)
    nb, tile_s = _ensure_min_steps(N, S, nb, tile_s, min_steps=2)

    grid = (N // nb, pl.cdiv(S, tile_s))             # ragged last block is masked

    w = params["w_conv"].astype(compute_dtype)       # (C_out, C_in)
    b = params["b_conv"].astype(jnp.float32)         # (C, 1)

    tile_set = 4 * nb * C * tile_s * itemsize        # in + out, double-buffered
    vmem_limit = int(min(max(tile_set + (8 << 20), 32 << 20), vmem_ceiling))

    cost = pl.CostEstimate(
        flops=2 * N * S * C * C + 10 * N * S * C,
        transcendentals=N * S * C,
        bytes_accessed=2 * N * S * C * itemsize + C * C * itemsize + C * 4,
    )

    kernel = functools.partial(_block_kernel, nb=nb, compute_dtype=compute_dtype)

    # NOTE: if tiles stay tiny (very small S), pipeline_mode=pl.Buffered(3) on
    # the x/out specs could hide more DMA latency; unnecessary at these tile
    # sizes once the VMEM-driven cap above is in effect.
    out = pl.pallas_call(
        kernel,
        out_shape=jax.ShapeDtypeStruct((N, C, S), io_dtype),
        grid_spec=pltpu.PrefetchScalarGridSpec(
            num_scalar_prefetch=0,
            grid=grid,
            in_specs=[
                pl.BlockSpec((nb, C, tile_s), lambda n, s: (n, 0, s)),
                pl.BlockSpec((C, C), lambda n, s: (0, 0)),
                pl.BlockSpec((C, 1), lambda n, s: (0, 0)),
            ],
            out_specs=pl.BlockSpec((nb, C, tile_s), lambda n, s: (n, 0, s)),
        ),
        compiler_params=pltpu.CompilerParams(
            dimension_semantics=("parallel", "parallel"),
            vmem_limit_bytes=vmem_limit,
        ),
        cost_estimate=cost,
    )(x, w, b)

    return out.reshape(N, C, H, W)


# ---------------------------------------------------------------------------
# pure-JAX reference + demo
# ---------------------------------------------------------------------------
def reference(x_nchw, cond, params):
    """Pure-JAX reference of the same forward semantics (cond ignored)."""
    x = x_nchw.astype(jnp.float32)
    h = _gelu_tanh(x)
    y = jnp.einsum("oi,nihw->nohw", params["w_conv"], h)
    y = y + params["b_conv"][None, :, :, None]       # (1, C, 1, 1)
    return y + x                                      # residual skip


def make_params(key, c):
    k1, k2 = jax.random.split(key)
    return {
        "w_conv": 0.1 * jax.random.normal(k1, (c, c), jnp.float32),  # (Cout, Cin)
        "b_conv": 0.1 * jax.random.normal(k2, (c, 1), jnp.float32),
    }


if __name__ == "__main__":
    key = jax.random.PRNGKey(0)
    kx, kc, kp = jax.random.split(key, 3)

    N, C, H, W = 2, 8, 16, 16        # S = 256 spatial positions
    COND_DIM = 16

    x = jax.random.normal(kx, (N, C, H, W), jnp.float32)       # NCHW, PyTorch-style
    cond = jax.random.normal(kc, (N, COND_DIM), jnp.float32)   # ignored by forward
    params = make_params(kp, C)

    fn = jax.jit(unconditioned_module)

    # f32 path: tight check against the pure-JAX reference.
    out = jax.block_until_ready(fn(x, cond, params))
    ref = reference(x, cond, params)
    assert out.shape == (N, C, H, W)
    assert out.dtype == x.dtype
    assert jnp.allclose(out, ref, atol=1e-4, rtol=1e-4), "f32 mismatch vs reference"

    # bf16 I/O path: halves HBM traffic; bf16 math on v6e/v7x, f32 elsewhere.
    out_bf16 = jax.block_until_ready(fn(x.astype(jnp.bfloat16), cond, params))
    assert out_bf16.dtype == jnp.bfloat16
    assert jnp.allclose(out_bf16.astype(jnp.float32), ref, atol=1e-1, rtol=1e-1), \
        "bf16 mismatch vs reference"

    print("KERNEL_OK")
</pallas_src>

<mosaic_0001>
module attributes {stable_mosaic.version = 11 : i64} {
  func.func @_block_kernel(%arg0: i32, %arg1: i32, %arg2: memref<1x8x256xf32, #tpu.memory_space<vmem>>, %arg3: memref<8x8xf32, #tpu.memory_space<vmem>>, %arg4: memref<8x1xf32, #tpu.memory_space<vmem>>, %arg5: memref<1x8x256xf32, #tpu.memory_space<vmem>>) attributes {dimension_semantics = [#tpu.dimension_semantics<parallel>, #tpu.dimension_semantics<parallel>], iteration_bounds = array<i64: 2, 1>, scalar_prefetch = 0 : i64, scratch_operands = 0 : i64, tpu.core_type = #tpu.core_type<tc>, window_params = [{transform_indices = @transform_0, window_bounds = array<i64: 1, 8, 256>}, {pipeline_mode = #tpu.pipeline_mode<synchronous>, transform_indices = @transform_1, window_bounds = array<i64: 8, 8>}, {pipeline_mode = #tpu.pipeline_mode<synchronous>, transform_indices = @transform_2, window_bounds = array<i64: 8, 1>}, {transform_indices = @transform_3, window_bounds = array<i64: 1, 8, 256>}]} {
    %c0 = arith.constant 0 : index
    %c0_0 = arith.constant 0 : index
    %c0_1 = arith.constant 0 : index
    %0 = vector.load %arg2[%c0, %c0_0, %c0_1] : memref<1x8x256xf32, #tpu.memory_space<vmem>>, vector<1x8x256xf32>
    %1 = arith.mulf %0, %0 : vector<1x8x256xf32>
    %cst = arith.constant 0.0356774069 : f32
    %2 = vector.broadcast %cst : f32 to vector<1x8x256xf32>
    %3 = arith.mulf %2, %1 : vector<1x8x256xf32>
    %cst_2 = arith.constant 0.797884583 : f32
    %4 = vector.broadcast %cst_2 : f32 to vector<1x8x256xf32>
    %5 = arith.addf %4, %3 : vector<1x8x256xf32>
    %6 = arith.mulf %0, %5 : vector<1x8x256xf32>
    %7 = math.tanh %6 : vector<1x8x256xf32>
    %cst_3 = arith.constant 5.000000e-01 : f32
    %8 = vector.broadcast %cst_3 : f32 to vector<1x8x256xf32>
    %9 = arith.mulf %8, %7 : vector<1x8x256xf32>
    %cst_4 = arith.constant 5.000000e-01 : f32
    %10 = vector.broadcast %cst_4 : f32 to vector<1x8x256xf32>
    %11 = arith.addf %10, %9 : vector<1x8x256xf32>
    %12 = arith.mulf %0, %11 : vector<1x8x256xf32>
    %c0_5 = arith.constant 0 : index
    %c0_6 = arith.constant 0 : index
    %13 = vector.load %arg3[%c0_5, %c0_6] : memref<8x8xf32, #tpu.memory_space<vmem>>, vector<8x8xf32>
    %c0_7 = arith.constant 0 : index
    %c0_8 = arith.constant 0 : index
    %14 = vector.load %arg4[%c0_7, %c0_8] : memref<8x1xf32, #tpu.memory_space<vmem>>, vector<8x1xf32>
    %15 = vector.shape_cast %12 : vector<1x8x256xf32> to vector<8x256xf32>
    %cst_9 = arith.constant dense<0.000000e+00> : vector<8x256xf32>
    %16 = tpu.matmul %13, %15, %cst_9 {dimension_numbers = #tpu.dot_dimension_numbers<[1], [0], [0], [1], [0, 0, 1, 1], [], []>} : vector<8x8xf32>, vector<8x256xf32>, vector<8x256xf32> -> vector<8x256xf32>
    %17 = vector.broadcast %14 : vector<8x1xf32> to vector<8x256xf32>
    %18 = arith.addf %16, %17 : vector<8x256xf32>
    %19 = vector.shape_cast %0 : vector<1x8x256xf32> to vector<8x256xf32>
    %20 = arith.addf %18, %19 : vector<8x256xf32>
    %c0_10 = arith.constant 0 : index
    %c0_11 = arith.constant 0 : index
    %c0_12 = arith.constant 0 : index
    %21 = vector.load %arg5[%c0_10, %c0_11, %c0_12] : memref<1x8x256xf32, #tpu.memory_space<vmem>>, vector<1x8x256xf32>
    %22 = vector.shape_cast %21 : vector<1x8x256xf32> to vector<8x256xf32>
    %23 = vector.shape_cast %20 : vector<8x256xf32> to vector<1x8x256xf32>
    tpu.vector_store %arg5[%c0_10, %c0_11, %c0_12], %23 {strides = array<i32>} : memref<1x8x256xf32, #tpu.memory_space<vmem>>, vector<1x8x256xf32>,
    return
  }
  func.func @transform_0(%arg0: i32, %arg1: i32) -> (i32, i32, i32) {
    %c0_i32 = arith.constant 0 : i32
    %c0_i32_0 = arith.constant 0 : i32
    return %arg0, %c0_i32, %arg1 : i32, i32, i32
  }
  func.func @transform_1(%arg0: i32, %arg1: i32) -> (i32, i32) {
    %c0_i32 = arith.constant 0 : i32
    %c0_i32_0 = arith.constant 0 : i32
    %c0_i32_1 = arith.constant 0 : i32
    return %c0_i32, %c0_i32_0 : i32, i32
  }
  func.func @transform_2(%arg0: i32, %arg1: i32) -> (i32, i32) {
    %c0_i32 = arith.constant 0 : i32
    %c0_i32_0 = arith.constant 0 : i32
    %c0_i32_1 = arith.constant 0 : i32
    return %c0_i32, %c0_i32_0 : i32, i32
  }
  func.func @transform_3(%arg0: i32, %arg1: i32) -> (i32, i32, i32) {
    %c0_i32 = arith.constant 0 : i32
    %c0_i32_0 = arith.constant 0 : i32
    return %arg0, %c0_i32, %arg1 : i32, i32, i32
  }
}

</mosaic_0001>

<llo_original>
// kernel: unconditioned_module.1
$region0: #{unconditioned_module.1}
  #allocation0 [shape = 'u32[]', space=smem, size = 0x4, offset = 0x4, fixed_abs, tag = 'smem constant byte address 0x4 - core index']
  #allocation1 [shape = 'u32[72,128]{1,0:T(1,128)}', space=vmem, size = 0x9000, scoped, tag = 'internal scratch']
  %s0 = inlined_call_operand.vmem [shape: f32[2,8,256], index: 0, kind: input, shape index: {}]
  %s1 = inlined_call_operand.vmem [shape: f32[8,8], index: 1, kind: input, shape index: {}]
  %s2 = inlined_call_operand.vmem [shape: f32[8,1], index: 2, kind: input, shape index: {}]
  %s3 = inlined_call_operand.vmem [shape: f32[2,8,256], index: 3, kind: output, shape index: {}]
  %s4 = sld [smem:[#allocation0]]
  $region45: #{unconditioned_module.1} parent=0
    _
  %s6 = ssub.s32 1, %s4
  %s7 = scalar_select 0, %s6, %s4
  loop: start=0, step=1, limit=4
  $region2: #{unconditioned_module.1} parent=0 // loop_pre_header
    _
  $region3: #{unconditioned_module.1} parent=0 // loop_header
    %s9 = sphi 0, %s13
    %p10 = scmp.ge.s32.totalorder %s9, 4
    %s16 = sphi 0, %s28
    %s17 = sphi 0, %s24
    %s18 = sphi 0, %s16
    %s19 = sphi 0, %s17
    %s20 = sphi 0, %s18
    %s21 = sphi 0, %s19
    %s33 = sphi 0, %s35
    %s36 = sphi 0, %s33
    %s37 = sphi 0, %s36
    %s53 = sphi 0, %s37
    %s57 = sphi 0, %s57
    %s59 = sphi 0, %s57
    %s60 = sphi 0, %s59
    %s74 = sphi 0, %s60
    %s78 = sphi 0, %s78
    %s80 = sphi 0, %s78
    %s81 = sphi 0, %s80
    %s95 = sphi 0, %s81
    %s103 = sphi 0, %s105
    %s106 = sphi 0, %s103
    %s107 = sphi 0, %s106
    %s123 = sphi 0, %s107
  $region4: #{unconditioned_module.1} parent=0 // loop_header_branch
    %12 = sbr.rel (%p10) target = $region8
  $region5: #{unconditioned_module.1} parent=0 // loop_body
    %s14 = ssub.s32 %s9, 1
    %s15 = ssub.s32 %s9, 2
    %s22 = sadd.s32 1, %s17
    %p23 = scmp.ge.s32.totalorder %s22, 1
    %s24 = scalar_select %p23, 0, %s22
    %s25 = sadd.s32 1, %s16
    %s26 = scalar_select %p23, %s25, %s16
    %p27 = scmp.ge.s32.totalorder %s26, 2
    %s28 = scalar_select %p27, 0, %s26
    %s29 = ssub.s32 %s16, %s28
    %s30 = ssub.s32 %s17, %s24
    %s31 = sor.u32 %s29, %s30
    %p32 = scmp.eq.s32.totalorder %s31, 0
    %s34 = sadd.s32 %s33, 1
    %s35 = scalar_select %p32, %s33, %s34
    %p38 = pneg %p32
    %p39 = scmp.eq.s32.totalorder %s9, 1
    %p40 = por %p38, %p39
    %p41 = scmp.ne.s32.totalorder %s33, %s36
    %p42 = scmp.eq.s32.totalorder %s9, 0
    %p43 = por %p41, %p42
    %p44 = scmp.ne.s32.totalorder %s33, %s36
    %p45 = scmp.eq.s32.totalorder %s14, 1
    %p46 = por %p44, %p45
    %p47 = scmp.ne.s32.totalorder %s36, %s37
    %p48 = scmp.eq.s32.totalorder %s14, 0
    %p49 = por %p47, %p48
    %p50 = scmp.ne.s32.totalorder %s36, %s37
    %p51 = scmp.eq.s32.totalorder %s15, 1
    %p52 = por %p50, %p51
    %p54 = scmp.ne.s32.totalorder %s37, %s53
    %p55 = scmp.eq.s32.totalorder %s15, 0
    %p56 = por %p54, %p55
    %s58 = sadd.s32 %s57, 1
    %p61 = scmp.eq.s32.totalorder %s9, 1
    %p62 = scmp.ne.s32.totalorder %s57, %s59
    %p63 = scmp.eq.s32.totalorder %s9, 0
    %p64 = por %p62, %p63
    %p65 = scmp.ne.s32.totalorder %s57, %s59
    %p66 = scmp.eq.s32.totalorder %s14, 1
    %p67 = por %p65, %p66
    %p68 = scmp.ne.s32.totalorder %s59, %s60
    %p69 = scmp.eq.s32.totalorder %s14, 0
    %p70 = por %p68, %p69
    %p71 = scmp.ne.s32.totalorder %s59, %s60
    %p72 = scmp.eq.s32.totalorder %s15, 1
    %p73 = por %p71, %p72
    %p75 = scmp.ne.s32.totalorder %s60, %s74
    %p76 = scmp.eq.s32.totalorder %s15, 0
    %p77 = por %p75, %p76
    %s79 = sadd.s32 %s78, 1
    %p82 = scmp.eq.s32.totalorder %s9, 1
    %p83 = scmp.ne.s32.totalorder %s78, %s80
    %p84 = scmp.eq.s32.totalorder %s9, 0
    %p85 = por %p83, %p84
    %p86 = scmp.ne.s32.totalorder %s78, %s80
    %p87 = scmp.eq.s32.totalorder %s14, 1
    %p88 = por %p86, %p87
    %p89 = scmp.ne.s32.totalorder %s80, %s81
    %p90 = scmp.eq.s32.totalorder %s14, 0
    %p91 = por %p89, %p90
    %p92 = scmp.ne.s32.totalorder %s80, %s81
    %p93 = scmp.eq.s32.totalorder %s15, 1
    %p94 = por %p92, %p93
    %p96 = scmp.ne.s32.totalorder %s81, %s95
    %p97 = scmp.eq.s32.totalorder %s15, 0
    %p98 = por %p96, %p97
    %s99 = ssub.s32 %s16, %s28
    %s100 = ssub.s32 %s17, %s24
    %s101 = sor.u32 %s99, %s100
    %p102 = scmp.eq.s32.totalorder %s101, 0
    %s104 = sadd.s32 %s103, 1
    %s105 = scalar_select %p102, %s103, %s104
    %p108 = pneg %p102
    %p109 = scmp.eq.s32.totalorder %s9, 1
    %p110 = por %p108, %p109
    %p111 = scmp.ne.s32.totalorder %s103, %s106
    %p112 = scmp.eq.s32.totalorder %s9, 0
    %p113 = por %p111, %p112
    %p114 = scmp.ne.s32.totalorder %s103, %s106
    %p115 = scmp.eq.s32.totalorder %s14, 1
    %p116 = por %p114, %p115
    %p117 = scmp.ne.s32.totalorder %s106, %s107
    %p118 = scmp.eq.s32.totalorder %s14, 0
    %p119 = por %p117, %p118
    %p120 = scmp.ne.s32.totalorder %s106, %s107
    %p121 = scmp.eq.s32.totalorder %s15, 1
    %p122 = por %p120, %p121
    %p124 = scmp.ne.s32.totalorder %s107, %s123
    %p125 = scmp.eq.s32.totalorder %s15, 0
    %p126 = por %p124, %p125
    %p127 = scmp.le.s32.totalorder 1, %s9
    %p128 = scmp.lt.s32.totalorder %s9, 3
    %p129 = pnand %p127, %p128
    %p130 = pneg %p129
    // Predicated region
    $region9: #{unconditioned_module.1} parent=5 // pred_check
      _
    $region10: #{unconditioned_module.1} parent=5 // pred_check_branch
      %132 = sbr.rel (%p129) target = $region12
    $region11: #{unconditioned_module.1} parent=5 // pred_region
      %s133 = ssub.s32 %s9, 1
      // Predicated region
      $region13: #{unconditioned_module.1} parent=11 // pred_check
        %p134 = pneg %p70
      $region14: #{unconditioned_module.1} parent=11 // pred_check_branch
        %136 = sbr.rel (%p134) target = $region16
      $region15: #{unconditioned_module.1} parent=11 // pred_region
        _
      $region16: #{unconditioned_module.1} parent=11 // pred_fallthru
        _
      // Predicated region
      $region17: #{unconditioned_module.1} parent=11 // pred_check
        %p137 = pneg %p91
      $region18: #{unconditioned_module.1} parent=11 // pred_check_branch
        %139 = sbr.rel (%p137) target = $region20
      $region19: #{unconditioned_module.1} parent=11 // pred_region
        _
      $region20: #{unconditioned_module.1} parent=11 // pred_fallthru
        _
    $region12: #{unconditioned_module.1} parent=5 // pred_fallthru
      _
    %p140 = scmp.lt.s32.totalorder %s9, 2
    // Predicated region
    $region21: #{unconditioned_module.1} parent=5 // pred_check
      %p141 = pneg %p140
    $region22: #{unconditioned_module.1} parent=5 // pred_check_branch
      %143 = sbr.rel (%p141) target = $region24
    $region23: #{unconditioned_module.1} parent=5 // pred_region
      // Predicated region
      $region25: #{unconditioned_module.1} parent=23 // pred_check
        %p144 = pneg %p43
      $region26: #{unconditioned_module.1} parent=23 // pred_check_branch
        %146 = sbr.rel (%p144) target = $region28
      $region27: #{unconditioned_module.1} parent=23 // pred_region
        %s147 = smul.u32 2, %s17
        %p148 = scmp.lt.s32.totalorder %s16, 1
        %s149 = scalar_select %p148, %s16, 1
        %p150 = scmp.lt.s32.totalorder %s147, 1
        %s151 = scalar_select %p150, %s147, 1
        %s152 = smul.addr %s149, 2
        %s153 = sadd.s32 %s151, %s152
        %s154 = smul.addr %s153, 8
        %s155 = scalar_lea.vmem %s0, %s154
        %s156 = smul.u32 2, %s17
      $region28: #{unconditioned_module.1} parent=23 // pred_fallthru
        _
    $region24: #{unconditioned_module.1} parent=5 // pred_fallthru
      _
    %p157 = scmp.le.s32.totalorder 1, %s9
    %p158 = scmp.lt.s32.totalorder %s9, 3
    %p159 = pnand %p157, %p158
    %p160 = pneg %p159
    // Predicated region
    $region29: #{unconditioned_module.1} parent=5 // pred_check
      _
    $region30: #{unconditioned_module.1} parent=5 // pred_check_branch
      %162 = sbr.rel (%p159) target = $region32
    $region31: #{unconditioned_module.1} parent=5 // pred_region
      %s163 = ssub.s32 %s9, 1
      %s164 = smul.u32 2, %s19
      %p165 = scmp.lt.s32.totalorder %s18, 1
      %s166 = scalar_select %p165, %s18, 1
      %p167 = scmp.lt.s32.totalorder %s164, 1
      %s168 = scalar_select %p167, %s164, 1
      %s169 = smul.addr %s166, 2
      %s170 = sadd.s32 %s168, %s169
      %s171 = smul.addr %s170, 8
      %s172 = scalar_lea.vmem %s0, %s171
      %p173 = pneg %p49
      %p174 = pneg %p46
      %p175 = pneg %p70
      %p176 = pneg %p67
      %p177 = pneg %p91
      %p178 = pneg %p88
      %p179 = pneg %p119
      %p180 = pneg %p116
      %s181 = smul.u32 2, %s19
      %p182 = scmp.lt.s32.totalorder %s18, 1
      %s183 = scalar_select %p182, %s18, 1
      %p184 = scmp.lt.s32.totalorder %s181, 1
      %s185 = scalar_select %p184, %s181, 1
      %s186 = smul.addr %s183, 2
      %s187 = sadd.s32 %s185, %s186
      %s188 = smul.addr %s187, 8
      %s189 = scalar_lea.vmem %s3, %s188
      %s190 = smul.u32 2, %s19
      %p191 = scmp.lt.s32.totalorder %s18, 1
      %s192 = scalar_select %p191, %s18, 1
      %p193 = scmp.lt.s32.totalorder %s190, 1
      %s194 = scalar_select %p193, %s190, 1
      %s195 = smul.addr %s192, 2
      %s196 = sadd.s32 %s194, %s195
      %s197 = smul.addr %s196, 8
      %s198 = scalar_lea.vmem %s0, %s197
      %s199 = smul.u32 2, %s19
      %s200 = smul.u32 2, %s19
      %p201 = scmp.lt.s32.totalorder %s18, 1
      %s202 = scalar_select %p201, %s18, 1
      %p203 = scmp.lt.s32.totalorder %s200, 1
      %s204 = scalar_select %p203, %s200, 1
      %s205 = smul.addr %s202, 2
      %s206 = sadd.s32 %s204, %s205
      %s207 = smul.addr %s206, 8
      %s208 = scalar_lea.vmem %s3, %s207
      %s209 = smul.u32 2, %s19
      %v210 = vld [vmem:[%s198] sm:$0xff]
      %v211 = vld [vmem:[%s198 + $0x8] sm:$0xff]
      %v212 = vmul.f32 %v210, %v210
      %v213 = vmul.f32 %v211, %v211
      %v214 = vmul.f32 %v212, 0.035677407
      %v215 = vmul.f32 %v213, 0.035677407
      %v216 = vadd.f32 %v214, 0.7978846
      %v217 = vadd.f32 %v215, 0.7978846
      %v218 = vmul.f32 %v210, %v216
      %v219 = vmul.f32 %v211, %v217
      %v220 = vtanh.pop %v218
      %v221 = vtanh.pop %v219
      %v222 = vmul.f32 %v220, 0.5
      %v223 = vmul.f32 %v221, 0.5
      %v224 = vadd.f32 %v222, 0.5
      %v225 = vadd.f32 %v223, 0.5
      %v226 = vmul.f32 %v210, %v224
      %v227 = vmul.f32 %v211, %v225
      %v228 = vld [vmem:[%s1] sm:$0xff]
      %v229 = vld [vmem:[%s2] sm:$0xff]
      %231 = vset.pattern.permute.xlu0 0
      %232 = vperm.xlu0 %231, %v229
      %v233 = vpop.permute.xlu0 %232
      %vm235 = vcmask 64512
      %v237 = vsel %vm235, %v228, 0
      %239 = vmatpush.msra.mxu0 0.0
      %240 = vmatpush.msra.mxu0 0.0
      %241 = vmatpush.msra.mxu0 0.0
      %242 = vmatpush.msra.mxu0 0.0
      %243 = vmatpush.msra.mxu0 0.0
      %244 = vmatpush.msra.mxu0 0.0
      %245 = vmatpush.msra.mxu0 0.0
      %246 = vmatpush.msra.mxu0 0.0
      %247 = vmatpush.msra.mxu0 0.0
      %248 = vmatpush.msra.mxu0 0.0
      %249 = vmatpush.msra.mxu0 0.0
      %250 = vmatpush.msra.mxu0 0.0
      %251 = vmatpush.msra.mxu0 0.0
      %252 = vmatpush.msra.mxu0 0.0
      %253 = vmatpush.msra.mxu0 0.0
      %254 = vmatpush.msra.mxu0 %v226
      %255 = vmatmul.f32.gmra.mxu0 %v237
      %v256 = vpop.f32.mrf.mxu0
      %v257 = vadd.f32 %v233, %v256
      %258 = vdwg.mxu0
      %259 = vmatpush.msra.mxu0 0.0
      %260 = vmatpush.msra.mxu0 0.0
      %261 = vmatpush.msra.mxu0 0.0
      %262 = vmatpush.msra.mxu0 0.0
      %263 = vmatpush.msra.mxu0 0.0
      %264 = vmatpush.msra.mxu0 0.0
      %265 = vmatpush.msra.mxu0 0.0
      %266 = vmatpush.msra.mxu0 0.0
      %267 = vmatpush.msra.mxu0 0.0
      %268 = vmatpush.msra.mxu0 0.0
      %269 = vmatpush.msra.mxu0 0.0
      %270 = vmatpush.msra.mxu0 0.0
      %271 = vmatpush.msra.mxu0 0.0
      %272 = vmatpush.msra.mxu0 0.0
      %273 = vmatpush.msra.mxu0 0.0
      %274 = vmatpush.msra.mxu0 %v227
      %275 = vmatmul.f32.gmra.mxu0 %v237
      %v276 = vpop.f32.mrf.mxu0
      %v277 = vadd.f32 %v233, %v276
      %278 = vdwg.mxu0
      %v279 = vadd.f32 %v257, %v210
      %v280 = vadd.f32 %v277, %v211
      %281 = vst [vmem:[%s208] sm:$0xff] %v279
      %282 = vst [vmem:[%s208 + $0x8] sm:$0xff] %v280
      %s283 = smul.u32 2, %s19
      %p284 = scmp.lt.s32.totalorder %s18, 1
      %s285 = scalar_select %p284, %s18, 1
      %p286 = scmp.lt.s32.totalorder %s283, 1
      %s287 = scalar_select %p286, %s283, 1
      %s288 = smul.addr %s285, 2
      %s289 = sadd.s32 %s287, %s288
      %s290 = smul.addr %s289, 8
      %s291 = scalar_lea.vmem %s3, %s290
      // Predicated region
      $region33: #{unconditioned_module.1} parent=31 // pred_check
        %p292 = pneg %p116
      $region34: #{unconditioned_module.1} parent=31 // pred_check_branch
        %294 = sbr.rel (%p292) target = $region36
      $region35: #{unconditioned_module.1} parent=31 // pred_region
        %s295 = smul.u32 2, %s19
      $region36: #{unconditioned_module.1} parent=31 // pred_fallthru
        _
    $region32: #{unconditioned_module.1} parent=5 // pred_fallthru
      _
    %p296 = scmp.le.s32.totalorder 2, %s9
    // Predicated region
    $region37: #{unconditioned_module.1} parent=5 // pred_check
      %p297 = pneg %p296
    $region38: #{unconditioned_module.1} parent=5 // pred_check_branch
      %299 = sbr.rel (%p297) target = $region40
    $region39: #{unconditioned_module.1} parent=5 // pred_region
      %s300 = ssub.s32 %s9, 2
      // Predicated region
      $region41: #{unconditioned_module.1} parent=39 // pred_check
        %p301 = pneg %p122
      $region42: #{unconditioned_module.1} parent=39 // pred_check_branch
        %303 = sbr.rel (%p301) target = $region44
      $region43: #{unconditioned_module.1} parent=39 // pred_region
        %s304 = smul.u32 2, %s21
        %p305 = scmp.lt.s32.totalorder %s20, 1
        %s306 = scalar_select %p305, %s20, 1
        %p307 = scmp.lt.s32.totalorder %s304, 1
        %s308 = scalar_select %p307, %s304, 1
        %s309 = smul.addr %s306, 2
        %s310 = sadd.s32 %s308, %s309
        %s311 = smul.addr %s310, 8
        %s312 = scalar_lea.vmem %s3, %s311
      $region44: #{unconditioned_module.1} parent=39 // pred_fallthru
        _
    $region40: #{unconditioned_module.1} parent=5 // pred_fallthru
      _
  $region6: #{unconditioned_module.1} parent=0 // loop_footer
    %s13 = sadd.s32 1, %s9
  $region7: #{unconditioned_module.1} parent=0 // loop_footer_branch
    %8 = sbr.rel target = $region3
  $region8: #{unconditioned_module.1} parent=0 // loop_exit
    _

</llo_original>
